<compile_context>
chip_gen: v7x
topology: tpu7x:2x2x1
jax: 0.10.0
libtpu: 0.0.40
codegen_flags: <defaults>
</compile_context>

<pallas_src>
import functools
import math

import jax
import jax.numpy as jnp
from jax.experimental import pallas as pl
from jax.experimental.pallas import tpu as pltpu


def _vmem_capacity_bytes():
    """Physical VMEM per TensorCore (128 MiB v5e/v6e, 64 MiB v7x)."""
    try:
        return int(pltpu.get_tpu_info().vmem_capacity_bytes)
    except Exception:
        return 64 << 20  # conservative fallback (v7x-sized)


def _label_smoothing_kernel(inp_ref, tgt_ref, msk_ref, num_ref, *,
                            smooth_val, confidence, const_c,
                            n_rows, row_tile, tiles_per_core):
    c = pl.program_id(0)   # core-split axis ("parallel")
    i = pl.program_id(1)   # row-tile axis   ("arbitrary", accumulating)

    @pl.when(i == 0)
    def _():
        num_ref[...] = jnp.zeros_like(num_ref)

    x = inp_ref[...]        # (TN, V) log-probs, native dtype (f32 or bf16)
    tgt = tgt_ref[...]      # (TN, 1) int32 targets
    msk = msk_ref[...]      # (TN, 1) f32 mask

    tn, v = x.shape

    # Row validity: the last tile is ragged (no HBM padding) and the core
    # split can produce a wholly-phantom tile.  Use a select, not a multiply,
    # so garbage/NaN rows cannot poison the accumulator.
    tile_idx = c * tiles_per_core + i
    row_ids = tile_idx * row_tile + jax.lax.broadcasted_iota(
        jnp.int32, (tn, 1), 0)
    valid = row_ids < n_rows                                     # (TN, 1)

    # Closed-form row KL:
    #   sum_v td_v*(log td_v - x_v)
    #     = C - [smooth * sum_v x_v + (conf - smooth) * x_target]
    col = jax.lax.broadcasted_iota(jnp.int32, (1, v), 1)         # (1, V)
    is_tgt = col == tgt                                          # (TN, V)
    zero = jnp.zeros((), dtype=x.dtype)
    x_tgt = jnp.sum(jnp.where(is_tgt, x, zero), axis=-1,
                    keepdims=True).astype(jnp.float32)           # (TN, 1)
    row_sum = jnp.sum(x.astype(jnp.float32), axis=-1, keepdims=True)

    cross = (jnp.float32(smooth_val) * row_sum
             + jnp.float32(confidence - smooth_val) * x_tgt)     # (TN, 1)
    row_kl = jnp.float32(const_c) - cross                        # (TN, 1)

    contrib = jnp.where(valid, row_kl * msk, jnp.float32(0.0))   # (TN, 1)
    # Broadcast-add the tile sum into the resident per-core accumulator block;
    # element [0, 0] of each core's block is read back in the wrapper.
    num_ref[...] += jnp.sum(contrib)


def label_smoothing_loss(inp, target, mask, *, smoothing=0.1, row_tile=None,
                         vmem_input_budget_bytes=None):
    """Pallas equivalent of LabelSmoothing.forward.

    inp:    (B, T, V) float32/bfloat16 log-probabilities
    target: (B, T')   int class indices (T' >= T)
    mask:   (B, T')   mask              (T' >= T)
    """
    confidence = 1.0 - float(smoothing)
    B, T, V = inp.shape
    smooth_val = float(smoothing) / (V - 1) if V > 1 else 0.0

    # Python-time constant  C = sum_v td*log(td)  (0*log0 = 0 convention).
    const_c = 0.0
    if confidence > 0.0:
        const_c += confidence * math.log(confidence)
    if smooth_val > 0.0:
        const_c += (V - 1) * smooth_val * math.log(smooth_val)

    # Glue (slice / flatten) in plain JAX, exactly like the torch module.
    target2 = target[:, :T].reshape(-1, 1).astype(jnp.int32)     # (N, 1)
    mask2 = mask[:, :T].reshape(-1, 1).astype(jnp.float32)       # (N, 1)
    inp2 = inp.reshape(-1, V)                                    # (N, V)
    if inp2.dtype not in (jnp.bfloat16, jnp.float32):
        inp2 = inp2.astype(jnp.float32)     # bf16 passes through un-cast
    N = inp2.shape[0]
    itemsize = jnp.dtype(inp2.dtype).itemsize
    sublane = 16 if inp2.dtype == jnp.bfloat16 else 8

    # Denominator is a tiny reduce — plain JAX, one fewer kernel output.
    den = jnp.sum(mask2)

    # Only if the whole problem has fewer rows than one sublane group, pad the
    # (tiny) tensors up to it.  The common ragged case costs no HBM copy.
    if N < sublane:
        pad = sublane - N
        inp2 = jnp.pad(inp2, ((0, pad), (0, 0)))
        target2 = jnp.pad(target2, ((0, pad), (0, 0)))
        mask2 = jnp.pad(mask2, ((0, pad), (0, 0)))
    n_avail = inp2.shape[0]

    # Generation-aware VMEM budget (128 MiB on v5e/v6e, 64 MiB on v7x).
    vmem_cap = _vmem_capacity_bytes()
    if vmem_input_budget_bytes is None:
        vmem_input_budget_bytes = min(int(0.35 * vmem_cap), 48 << 20)

    # Bytes per row of double-buffered operands.  The (row_tile, 1) target and
    # mask blocks pad to 128 lanes in VMEM, so they cost 128*4 B per row each.
    per_row_bytes = V * itemsize + 2 * 128 * 4

    if row_tile is None:
        max_rows = vmem_input_budget_bytes // (2 * per_row_bytes)
        row_tile = int(max(sublane, (max_rows // sublane) * sublane))
    row_tile = max(sublane, (int(row_tile) // sublane) * sublane)
    # Hard ceiling: never let the pipelined operands claim > ~60% of VMEM.
    # TODO(synk): tile the vocab axis too if even one sublane group of rows
    # cannot fit VMEM (extremely large V).
    hard_rows = max(sublane, ((int(0.6 * vmem_cap) // (2 * per_row_bytes))
                              // sublane) * sublane)
    row_tile = min(row_tile, hard_rows)
    # Keep the block within the array (a partial *last* tile is fine; a block
    # larger than the whole array is not).
    row_tile = min(row_tile, max(sublane, (n_avail // sublane) * sublane))

    n_tiles = -(-n_avail // row_tile)

    # Two-way core split: leading "parallel" axis keeps both TensorCores busy
    # on v7x; on single-core v5e/v6e it simply runs serially (measured no-op).
    num_split = 2
    tiles_per_core = -(-n_tiles // num_split)
    last_tile = n_tiles - 1

    footprint = 2 * row_tile * per_row_bytes + (1 << 20)
    vmem_limit = int(min(int(0.75 * vmem_cap), footprint + (24 << 20)))
    vmem_limit = max(vmem_limit, footprint + (4 << 20), 16 << 20)

    kernel = functools.partial(_label_smoothing_kernel,
                               smooth_val=smooth_val,
                               confidence=confidence,
                               const_c=const_c,
                               n_rows=N,
                               row_tile=row_tile,
                               tiles_per_core=tiles_per_core)

    def in_map(c, i):
        # Clamp so a phantom tile (core-split remainder) never indexes past
        # the array; its rows are zeroed in-kernel by the validity predicate.
        return (jnp.minimum(c * tiles_per_core + i, last_tile), 0)

    partials = pl.pallas_call(
        kernel,
        out_shape=jax.ShapeDtypeStruct((num_split, 8, 128), jnp.float32),
        grid_spec=pltpu.PrefetchScalarGridSpec(
            num_scalar_prefetch=0,
            grid=(num_split, tiles_per_core),
            in_specs=[
                pl.BlockSpec((row_tile, V), in_map),
                pl.BlockSpec((row_tile, 1), in_map),
                pl.BlockSpec((row_tile, 1), in_map),
            ],
            out_specs=pl.BlockSpec((1, 8, 128), lambda c, i: (c, 0, 0)),
        ),
        compiler_params=pltpu.CompilerParams(
            dimension_semantics=("parallel", "arbitrary"),
            vmem_limit_bytes=vmem_limit),
    )(inp2, target2, mask2)

    num = jnp.sum(partials[:, 0, 0])
    return num / den


def _reference(inp, target, mask, smoothing):
    # Pure-JAX reference of the torch forward (original td / log formulation),
    # used to validate the in-kernel closed-form rewrite.
    confidence = 1.0 - smoothing
    B, T, V = inp.shape
    target = target[:, :T].reshape(-1)
    mask = mask[:, :T].reshape(-1).astype(jnp.float32)
    x = inp.reshape(-1, V).astype(jnp.float32)
    td = jnp.full_like(x, smoothing / (V - 1))
    td = td.at[jnp.arange(x.shape[0]), target].set(confidence)
    safe_log = jnp.where(td > 0, jnp.log(jnp.where(td > 0, td, 1.0)), 0.0)
    kl = jnp.where(td > 0, td * (safe_log - x), 0.0)
    return (kl.sum(-1) * mask).sum() / mask.sum()


if __name__ == "__main__":
    key = jax.random.PRNGKey(0)
    B, T, Tfull, V = 2, 8, 12, 32
    smoothing = 0.1

    k1, k2, k3 = jax.random.split(key, 3)
    logits = jax.random.normal(k1, (B, T, V), dtype=jnp.float32)
    log_probs = jax.nn.log_softmax(logits, axis=-1)
    target = jax.random.randint(k2, (B, Tfull), 0, V, dtype=jnp.int32)
    mask = (jax.random.uniform(k3, (B, Tfull)) > 0.2).astype(jnp.float32)
    # Ensure mask.sum() > 0 on the sliced region.
    mask = mask.at[0, 0].set(1.0)

    loss = label_smoothing_loss(log_probs, target, mask, smoothing=smoothing)
    loss = jax.block_until_ready(loss)

    ref = _reference(log_probs, target, mask, smoothing)
    assert jnp.allclose(loss, ref, rtol=1e-4, atol=1e-4), (loss, ref)

    print("KERNEL_OK")
</pallas_src>

<mosaic_0001>
module attributes {stable_mosaic.version = 11 : i64} {
  func.func @_label_smoothing_kernel(%arg0: i32, %arg1: i32, %arg2: memref<16x32xf32, #tpu.memory_space<vmem>>, %arg3: memref<16x1xi32, #tpu.memory_space<vmem>>, %arg4: memref<16x1xf32, #tpu.memory_space<vmem>>, %arg5: memref<1x8x128xf32, #tpu.memory_space<vmem>>) attributes {dimension_semantics = [#tpu.dimension_semantics<parallel>, #tpu.dimension_semantics<arbitrary>], iteration_bounds = array<i64: 2, 1>, scalar_prefetch = 0 : i64, scratch_operands = 0 : i64, tpu.core_type = #tpu.core_type<tc>, window_params = [{transform_indices = @transform_0, window_bounds = array<i64: 16, 32>}, {transform_indices = @transform_1, window_bounds = array<i64: 16, 1>}, {transform_indices = @transform_2, window_bounds = array<i64: 16, 1>}, {transform_indices = @transform_3, window_bounds = array<i64: 1, 8, 128>}]} {
    %c0_i32 = arith.constant 0 : i32
    %0 = arith.cmpi eq, %arg1, %c0_i32 : i32
    %1 = arith.extui %0 : i1 to i32
    %c0_i32_0 = arith.constant 0 : i32
    %2 = arith.cmpi ne, %1, %c0_i32_0 : i32
    scf.if %2 {
      %cst_20 = arith.constant 0.000000e+00 : f32
      %42 = vector.broadcast %cst_20 : f32 to vector<1x8x128xf32>
      %c0_21 = arith.constant 0 : index
      %c0_22 = arith.constant 0 : index
      %c0_23 = arith.constant 0 : index
      %43 = vector.load %arg5[%c0_21, %c0_22, %c0_23] : memref<1x8x128xf32, #tpu.memory_space<vmem>>, vector<1x8x128xf32>
      tpu.vector_store %arg5[%c0_21, %c0_22, %c0_23], %42 {strides = array<i32>} : memref<1x8x128xf32, #tpu.memory_space<vmem>>, vector<1x8x128xf32>,
    } else {
    }
    %c0 = arith.constant 0 : index
    %c0_1 = arith.constant 0 : index
    %3 = vector.load %arg2[%c0, %c0_1] : memref<16x32xf32, #tpu.memory_space<vmem>>, vector<16x32xf32>
    %c0_2 = arith.constant 0 : index
    %c0_3 = arith.constant 0 : index
    %4 = vector.load %arg3[%c0_2, %c0_3] : memref<16x1xi32, #tpu.memory_space<vmem>>, vector<16x1xi32>
    %c0_4 = arith.constant 0 : index
    %c0_5 = arith.constant 0 : index
    %5 = vector.load %arg4[%c0_4, %c0_5] : memref<16x1xf32, #tpu.memory_space<vmem>>, vector<16x1xf32>
    %c1_i32 = arith.constant 1 : i32
    %6 = arith.muli %arg0, %c1_i32 : i32
    %7 = arith.addi %6, %arg1 : i32
    %c16_i32 = arith.constant 16 : i32
    %8 = arith.muli %7, %c16_i32 : i32
    %9 = tpu.iota {dimensions = array<i32: 0>} : vector<16x1xi32>
    %10 = vector.broadcast %8 : i32 to vector<16x1xi32>
    %11 = arith.addi %10, %9 : vector<16x1xi32>
    %c16_i32_6 = arith.constant 16 : i32
    %12 = vector.broadcast %c16_i32_6 : i32 to vector<16x1xi32>
    %13 = arith.cmpi slt, %11, %12 : vector<16x1xi32>
    %14 = tpu.iota {dimensions = array<i32: 1>} : vector<1x32xi32>
    %15 = vector.broadcast %14 : vector<1x32xi32> to vector<16x32xi32>
    %16 = vector.broadcast %4 : vector<16x1xi32> to vector<16x32xi32>
    %17 = arith.cmpi eq, %15, %16 : vector<16x32xi32>
    %cst = arith.constant 0.000000e+00 : f32
    %18 = vector.broadcast %cst : f32 to vector<16x32xf32>
    %19 = arith.select %17, %3, %18 : vector<16x32xi1>, vector<16x32xf32>
    %cst_7 = arith.constant dense<0.000000e+00> : vector<16xf32>
    %20 = vector.multi_reduction <add>, %19, %cst_7 [1] : vector<16x32xf32> to vector<16xf32>
    %21 = vector.shape_cast %20 : vector<16xf32> to vector<16x1xf32>
    %cst_8 = arith.constant dense<0.000000e+00> : vector<16xf32>
    %22 = vector.multi_reduction <add>, %3, %cst_8 [1] : vector<16x32xf32> to vector<16xf32>
    %23 = vector.shape_cast %22 : vector<16xf32> to vector<16x1xf32>
    %cst_9 = arith.constant 0.0032258064 : f32
    %24 = vector.broadcast %cst_9 : f32 to vector<16x1xf32>
    %25 = arith.mulf %24, %23 : vector<16x1xf32>
    %cst_10 = arith.constant 0.896774172 : f32
    %26 = vector.broadcast %cst_10 : f32 to vector<16x1xf32>
    %27 = arith.mulf %26, %21 : vector<16x1xf32>
    %28 = arith.addf %25, %27 : vector<16x1xf32>
    %cst_11 = arith.constant -0.668481708 : f32
    %29 = vector.broadcast %cst_11 : f32 to vector<16x1xf32>
    %30 = arith.subf %29, %28 : vector<16x1xf32>
    %31 = arith.mulf %30, %5 : vector<16x1xf32>
    %cst_12 = arith.constant 0.000000e+00 : f32
    %32 = vector.broadcast %cst_12 : f32 to vector<16x1xf32>
    %33 = arith.select %13, %31, %32 : vector<16x1xi1>, vector<16x1xf32>
    %c0_13 = arith.constant 0 : index
    %c0_14 = arith.constant 0 : index
    %c0_15 = arith.constant 0 : index
    %34 = vector.load %arg5[%c0_13, %c0_14, %c0_15] : memref<1x8x128xf32, #tpu.memory_space<vmem>>, vector<1x8x128xf32>
    %35 = vector.shape_cast %33 : vector<16x1xf32> to vector<1x16x1xf32>
    %cst_16 = arith.constant dense<0.000000e+00> : vector<1xf32>
    %36 = vector.multi_reduction <add>, %35, %cst_16 [1, 2] : vector<1x16x1xf32> to vector<1xf32>
    %37 = vector.shape_cast %36 : vector<1xf32> to vector<1x1x1xf32>
    %38 = vector.extract %37[0, 0, 0] : f32 from vector<1x1x1xf32>
    %39 = vector.broadcast %38 : f32 to vector<1x8x128xf32>
    %40 = arith.addf %34, %39 : vector<1x8x128xf32>
    %c0_17 = arith.constant 0 : index
    %c0_18 = arith.constant 0 : index
    %c0_19 = arith.constant 0 : index
    %41 = vector.load %arg5[%c0_17, %c0_18, %c0_19] : memref<1x8x128xf32, #tpu.memory_space<vmem>>, vector<1x8x128xf32>
    tpu.vector_store %arg5[%c0_17, %c0_18, %c0_19], %40 {strides = array<i32>} : memref<1x8x128xf32, #tpu.memory_space<vmem>>, vector<1x8x128xf32>,
    return
  }
  func.func @transform_0(%arg0: i32, %arg1: i32) -> (i32, i32) {
    %c1_i32 = arith.constant 1 : i32
    %0 = arith.muli %arg0, %c1_i32 : i32
    %1 = arith.addi %0, %arg1 : i32
    %c0_i32 = arith.constant 0 : i32
    %2 = arith.minsi %1, %c0_i32 : i32
    %c0_i32_0 = arith.constant 0 : i32
    %c0_i32_1 = arith.constant 0 : i32
    return %2, %c0_i32_0 : i32, i32
  }
  func.func @transform_1(%arg0: i32, %arg1: i32) -> (i32, i32) {
    %c1_i32 = arith.constant 1 : i32
    %0 = arith.muli %arg0, %c1_i32 : i32
    %1 = arith.addi %0, %arg1 : i32
    %c0_i32 = arith.constant 0 : i32
    %2 = arith.minsi %1, %c0_i32 : i32
    %c0_i32_0 = arith.constant 0 : i32
    %c0_i32_1 = arith.constant 0 : i32
    return %2, %c0_i32_0 : i32, i32
  }
  func.func @transform_2(%arg0: i32, %arg1: i32) -> (i32, i32) {
    %c1_i32 = arith.constant 1 : i32
    %0 = arith.muli %arg0, %c1_i32 : i32
    %1 = arith.addi %0, %arg1 : i32
    %c0_i32 = arith.constant 0 : i32
    %2 = arith.minsi %1, %c0_i32 : i32
    %c0_i32_0 = arith.constant 0 : i32
    %c0_i32_1 = arith.constant 0 : i32
    return %2, %c0_i32_0 : i32, i32
  }
  func.func @transform_3(%arg0: i32, %arg1: i32) -> (i32, i32, i32) {
    %c0_i32 = arith.constant 0 : i32
    %c0_i32_0 = arith.constant 0 : i32
    %c0_i32_1 = arith.constant 0 : i32
    return %arg0, %c0_i32, %c0_i32_0 : i32, i32, i32
  }
}

</mosaic_0001>

<llo_original>
// kernel: tpu_custom_call.1
$region0: #{tpu_custom_call.1}
  #allocation0 [shape = 'u32[]', space=smem, size = 0x4, offset = 0x4, fixed_abs, tag = 'smem constant byte address 0x4 - core index']
  #allocation1 [shape = 'u32[144,128]{1,0:T(1,128)}', space=vmem, size = 0x12000, scoped, tag = 'internal scratch']
  %s0 = inlined_call_operand.vmem [shape: f32[16,32], index: 0, kind: input, shape index: {}]
  %s1 = inlined_call_operand.vmem [shape: s32[16,1], index: 1, kind: input, shape index: {}]
  %s2 = inlined_call_operand.vmem [shape: f32[16,1], index: 2, kind: input, shape index: {}]
  %s3 = inlined_call_operand.hbm [shape: f32[2,8,128], index: 3, kind: output, shape index: {}]
  %s4 = sld [smem:[#allocation0]]
  $region49: #{tpu_custom_call.1} parent=0
    _
  %s6 = ssub.s32 1, %s4
  %s7 = scalar_select 0, %s6, %s4
  $region1: #{tpu_custom_call.1} parent=0
    #allocation2 [shape = 'u8[8192]{0}', space=vmem, size = 0x2000, scoped, tag = 'output window, operand 0']
    #allocation3 [shape = 's32[2]{0}', space=sflag, size = 0x8, scoped, tag = 'scoped memory for tpu_custom_call.1']
    %8 = vsyncpa [#allocation3], 0
    %s9 = scalar_lea.sflag [#allocation3], 1
    %10 = vsyncpa %s9, 0
    loop: start=0, step=1, limit=4
    $region2: #{tpu_custom_call.1} parent=1 // loop_pre_header
      _
    $region3: #{tpu_custom_call.1} parent=1 // loop_header
      %s12 = sphi 0, %s16
      %p13 = scmp.ge.s32.totalorder %s12, 4
      %s19 = sphi 0, %s31
      %s20 = sphi 0, %s27
      %s21 = sphi 0, %s19
      %s22 = sphi 0, %s20
      %s23 = sphi 0, %s21
      %s24 = sphi 0, %s22
      %s40 = sphi 0, %s42
      %s43 = sphi 0, %s40
      %s44 = sphi 0, %s43
      %s60 = sphi 0, %s44
      %s72 = sphi 0, %s74
      %s75 = sphi 0, %s72
      %s76 = sphi 0, %s75
      %s92 = sphi 0, %s76
      %s104 = sphi 0, %s106
      %s107 = sphi 0, %s104
      %s108 = sphi 0, %s107
      %s124 = sphi 0, %s108
      %s130 = sphi 0, %s132
      %s133 = sphi 0, %s130
      %s134 = sphi 0, %s133
      %s150 = sphi 0, %s134
    $region4: #{tpu_custom_call.1} parent=1 // loop_header_branch
      %15 = sbr.rel (%p13) target = $region8
    $region5: #{tpu_custom_call.1} parent=1 // loop_body
      %s17 = ssub.s32 %s12, 1
      %s18 = ssub.s32 %s12, 2
      %s25 = sadd.s32 1, %s20
      %p26 = scmp.ge.s32.totalorder %s25, 1
      %s27 = scalar_select %p26, 0, %s25
      %s28 = sadd.s32 1, %s19
      %s29 = scalar_select %p26, %s28, %s19
      %p30 = scmp.ge.s32.totalorder %s29, 2
      %s31 = scalar_select %p30, 0, %s29
      %s32 = sadd.s32 %s19, %s20
      %p33 = scmp.lt.s32.totalorder %s32, 0
      %s34 = scalar_select %p33, %s32, 0
      %s35 = sadd.s32 %s31, %s27
      %p36 = scmp.lt.s32.totalorder %s35, 0
      %s37 = scalar_select %p36, %s35, 0
      %s38 = ssub.s32 %s34, %s37
      %p39 = scmp.eq.s32.totalorder %s38, 0
      %s41 = sadd.s32 %s40, 1
      %s42 = scalar_select %p39, %s40, %s41
      %p45 = pneg %p39
      %p46 = scmp.eq.s32.totalorder %s12, 1
      %p47 = por %p45, %p46
      %p48 = scmp.ne.s32.totalorder %s40, %s43
      %p49 = scmp.eq.s32.totalorder %s12, 0
      %p50 = por %p48, %p49
      %p51 = scmp.ne.s32.totalorder %s40, %s43
      %p52 = scmp.eq.s32.totalorder %s17, 1
      %p53 = por %p51, %p52
      %p54 = scmp.ne.s32.totalorder %s43, %s44
      %p55 = scmp.eq.s32.totalorder %s17, 0
      %p56 = por %p54, %p55
      %p57 = scmp.ne.s32.totalorder %s43, %s44
      %p58 = scmp.eq.s32.totalorder %s18, 1
      %p59 = por %p57, %p58
      %p61 = scmp.ne.s32.totalorder %s44, %s60
      %p62 = scmp.eq.s32.totalorder %s18, 0
      %p63 = por %p61, %p62
      %s64 = sadd.s32 %s19, %s20
      %p65 = scmp.lt.s32.totalorder %s64, 0
      %s66 = scalar_select %p65, %s64, 0
      %s67 = sadd.s32 %s31, %s27
      %p68 = scmp.lt.s32.totalorder %s67, 0
      %s69 = scalar_select %p68, %s67, 0
      %s70 = ssub.s32 %s66, %s69
      %p71 = scmp.eq.s32.totalorder %s70, 0
      %s73 = sadd.s32 %s72, 1
      %s74 = scalar_select %p71, %s72, %s73
      %p77 = pneg %p71
      %p78 = scmp.eq.s32.totalorder %s12, 1
      %p79 = por %p77, %p78
      %p80 = scmp.ne.s32.totalorder %s72, %s75
      %p81 = scmp.eq.s32.totalorder %s12, 0
      %p82 = por %p80, %p81
      %p83 = scmp.ne.s32.totalorder %s72, %s75
      %p84 = scmp.eq.s32.totalorder %s17, 1
      %p85 = por %p83, %p84
      %p86 = scmp.ne.s32.totalorder %s75, %s76
      %p87 = scmp.eq.s32.totalorder %s17, 0
      %p88 = por %p86, %p87
      %p89 = scmp.ne.s32.totalorder %s75, %s76
      %p90 = scmp.eq.s32.totalorder %s18, 1
      %p91 = por %p89, %p90
      %p93 = scmp.ne.s32.totalorder %s76, %s92
      %p94 = scmp.eq.s32.totalorder %s18, 0
      %p95 = por %p93, %p94
      %s96 = sadd.s32 %s19, %s20
      %p97 = scmp.lt.s32.totalorder %s96, 0
      %s98 = scalar_select %p97, %s96, 0
      %s99 = sadd.s32 %s31, %s27
      %p100 = scmp.lt.s32.totalorder %s99, 0
      %s101 = scalar_select %p100, %s99, 0
      %s102 = ssub.s32 %s98, %s101
      %p103 = scmp.eq.s32.totalorder %s102, 0
      %s105 = sadd.s32 %s104, 1
      %s106 = scalar_select %p103, %s104, %s105
      %p109 = pneg %p103
      %p110 = scmp.eq.s32.totalorder %s12, 1
      %p111 = por %p109, %p110
      %p112 = scmp.ne.s32.totalorder %s104, %s107
      %p113 = scmp.eq.s32.totalorder %s12, 0
      %p114 = por %p112, %p113
      %p115 = scmp.ne.s32.totalorder %s104, %s107
      %p116 = scmp.eq.s32.totalorder %s17, 1
      %p117 = por %p115, %p116
      %p118 = scmp.ne.s32.totalorder %s107, %s108
      %p119 = scmp.eq.s32.totalorder %s17, 0
      %p120 = por %p118, %p119
      %p121 = scmp.ne.s32.totalorder %s107, %s108
      %p122 = scmp.eq.s32.totalorder %s18, 1
      %p123 = por %p121, %p122
      %p125 = scmp.ne.s32.totalorder %s108, %s124
      %p126 = scmp.eq.s32.totalorder %s18, 0
      %p127 = por %p125, %p126
      %s128 = ssub.s32 %s19, %s31
      %p129 = scmp.eq.s32.totalorder %s128, 0
      %s131 = sadd.s32 %s130, 1
      %s132 = scalar_select %p129, %s130, %s131
      %p135 = pneg %p129
      %p136 = scmp.eq.s32.totalorder %s12, 1
      %p137 = por %p135, %p136
      %p138 = scmp.ne.s32.totalorder %s130, %s133
      %p139 = scmp.eq.s32.totalorder %s12, 0
      %p140 = por %p138, %p139
      %p141 = scmp.ne.s32.totalorder %s130, %s133
      %p142 = scmp.eq.s32.totalorder %s17, 1
      %p143 = por %p141, %p142
      %p144 = scmp.ne.s32.totalorder %s133, %s134
      %p145 = scmp.eq.s32.totalorder %s17, 0
      %p146 = por %p144, %p145
      %p147 = scmp.ne.s32.totalorder %s133, %s134
      %p148 = scmp.eq.s32.totalorder %s18, 1
      %p149 = por %p147, %p148
      %p151 = scmp.ne.s32.totalorder %s134, %s150
      %p152 = scmp.eq.s32.totalorder %s18, 0
      %p153 = por %p151, %p152
      %p154 = scmp.le.s32.totalorder 1, %s12
      %p155 = scmp.lt.s32.totalorder %s12, 3
      %p156 = pnand %p154, %p155
      %p157 = pneg %p156
      // Predicated region
      $region9: #{tpu_custom_call.1} parent=5 // pred_check
        _
      $region10: #{tpu_custom_call.1} parent=5 // pred_check_branch
        %159 = sbr.rel (%p156) target = $region12
      $region11: #{tpu_custom_call.1} parent=5 // pred_region
        %s160 = ssub.s32 %s12, 1
      $region12: #{tpu_custom_call.1} parent=5 // pred_fallthru
        _
      %p161 = scmp.lt.s32.totalorder %s12, 2
      // Predicated region
      $region13: #{tpu_custom_call.1} parent=5 // pred_check
        %p162 = pneg %p161
      $region14: #{tpu_custom_call.1} parent=5 // pred_check_branch
        %164 = sbr.rel (%p162) target = $region16
      $region15: #{tpu_custom_call.1} parent=5 // pred_region
        // Predicated region
        $region17: #{tpu_custom_call.1} parent=15 // pred_check
          %p165 = pneg %p50
        $region18: #{tpu_custom_call.1} parent=15 // pred_check_branch
          %167 = sbr.rel (%p165) target = $region20
        $region19: #{tpu_custom_call.1} parent=15 // pred_region
          %s168 = sadd.s32 %s19, %s20
          %p169 = scmp.lt.s32.totalorder %s168, 0
          %s170 = scalar_select %p169, %s168, 0
          %s171 = smul.u32 2, %s170
          %p172 = scmp.lt.s32.totalorder %s171, 1
          %s173 = scalar_select %p172, %s171, 1
          %s174 = smul.addr %s173, 8
          %s175 = scalar_lea.vmem %s0, %s174
          %s176 = sadd.s32 %s19, %s20
          %p177 = scmp.lt.s32.totalorder %s176, 0
          %s178 = scalar_select %p177, %s176, 0
          %s179 = smul.u32 2, %s178
        $region20: #{tpu_custom_call.1} parent=15 // pred_fallthru
          _
        // Predicated region
        $region21: #{tpu_custom_call.1} parent=15 // pred_check
          %p180 = pneg %p82
        $region22: #{tpu_custom_call.1} parent=15 // pred_check_branch
          %182 = sbr.rel (%p180) target = $region24
        $region23: #{tpu_custom_call.1} parent=15 // pred_region
          %s183 = sadd.s32 %s19, %s20
          %p184 = scmp.lt.s32.totalorder %s183, 0
          %s185 = scalar_select %p184, %s183, 0
          %s186 = smul.u32 2, %s185
          %p187 = scmp.lt.s32.totalorder %s186, 1
          %s188 = scalar_select %p187, %s186, 1
          %s189 = smul.addr %s188, 8
          %s190 = scalar_lea.vmem %s1, %s189
          %s191 = sadd.s32 %s19, %s20
          %p192 = scmp.lt.s32.totalorder %s191, 0
          %s193 = scalar_select %p192, %s191, 0
          %s194 = smul.u32 2, %s193
        $region24: #{tpu_custom_call.1} parent=15 // pred_fallthru
          _
        // Predicated region
        $region25: #{tpu_custom_call.1} parent=15 // pred_check
          %p195 = pneg %p114
        $region26: #{tpu_custom_call.1} parent=15 // pred_check_branch
          %197 = sbr.rel (%p195) target = $region28
        $region27: #{tpu_custom_call.1} parent=15 // pred_region
          %s198 = sadd.s32 %s19, %s20
          %p199 = scmp.lt.s32.totalorder %s198, 0
          %s200 = scalar_select %p199, %s198, 0
          %s201 = smul.u32 2, %s200
          %p202 = scmp.lt.s32.totalorder %s201, 1
          %s203 = scalar_select %p202, %s201, 1
          %s204 = smul.addr %s203, 8
          %s205 = scalar_lea.vmem %s2, %s204
          %s206 = sadd.s32 %s19, %s20
          %p207 = scmp.lt.s32.totalorder %s206, 0
          %s208 = scalar_select %p207, %s206, 0
          %s209 = smul.u32 2, %s208
        $region28: #{tpu_custom_call.1} parent=15 // pred_fallthru
          _
      $region16: #{tpu_custom_call.1} parent=5 // pred_fallthru
        _
      %p210 = scmp.le.s32.totalorder 1, %s12
      %p211 = scmp.lt.s32.totalorder %s12, 3
      %p212 = pnand %p210, %p211
      %p213 = pneg %p212
      // Predicated region
      $region29: #{tpu_custom_call.1} parent=5 // pred_check
        _
      $region30: #{tpu_custom_call.1} parent=5 // pred_check_branch
        %215 = sbr.rel (%p212) target = $region32
      $region31: #{tpu_custom_call.1} parent=5 // pred_region
        %s216 = ssub.s32 %s12, 1
        %s217 = sadd.s32 %s21, %s22
        %p218 = scmp.lt.s32.totalorder %s217, 0
        %s219 = scalar_select %p218, %s217, 0
        %s220 = smul.u32 2, %s219
        %p221 = scmp.lt.s32.totalorder %s220, 1
        %s222 = scalar_select %p221, %s220, 1
        %s223 = smul.addr %s222, 8
        %s224 = scalar_lea.vmem %s0, %s223
        %p225 = pneg %p56
        %p226 = pneg %p53
        %s227 = sadd.s32 %s21, %s22
        %p228 = scmp.lt.s32.totalorder %s227, 0
        %s229 = scalar_select %p228, %s227, 0
        %s230 = smul.u32 2, %s229
        %p231 = scmp.lt.s32.totalorder %s230, 1
        %s232 = scalar_select %p231, %s230, 1
        %s233 = smul.addr %s232, 8
        %s234 = scalar_lea.vmem %s1, %s233
        %p235 = pneg %p88
        %p236 = pneg %p85
        %s237 = sadd.s32 %s21, %s22
        %p238 = scmp.lt.s32.totalorder %s237, 0
        %s239 = scalar_select %p238, %s237, 0
        %s240 = smul.u32 2, %s239
        %p241 = scmp.lt.s32.totalorder %s240, 1
        %s242 = scalar_select %p241, %s240, 1
        %s243 = smul.addr %s242, 8
        %s244 = scalar_lea.vmem %s2, %s243
        %p245 = pneg %p120
        %p246 = pneg %p117
        %p247 = pneg %p146
        %p248 = pneg %p143
        %s249 = sand.u32 %s133, 1
        %s250 = scalar_lea.sflag [#allocation3], %s249
        %s251 = sand.u32 %s133, 1
        %s252 = smul.addr %s251, 8
        %s253 = scalar_lea.vmem [#allocation2], %s252
        %s254 = sadd.s32 %s21, %s22
        %p255 = scmp.lt.s32.totalorder %s254, 0
        %s256 = scalar_select %p255, %s254, 0
        %s257 = smul.u32 2, %s256
        %p258 = scmp.lt.s32.totalorder %s257, 1
        %s259 = scalar_select %p258, %s257, 1
        %s260 = smul.addr %s259, 8
        %s261 = scalar_lea.vmem %s0, %s260
        %s262 = sadd.s32 %s21, %s22
        %p263 = scmp.lt.s32.totalorder %s262, 0
        %s264 = scalar_select %p263, %s262, 0
        %s265 = smul.u32 2, %s264
        %s266 = sadd.s32 %s21, %s22
        %p267 = scmp.lt.s32.totalorder %s266, 0
        %s268 = scalar_select %p267, %s266, 0
        %s269 = smul.u32 2, %s268
        %p270 = scmp.lt.s32.totalorder %s269, 1
        %s271 = scalar_select %p270, %s269, 1
        %s272 = smul.addr %s271, 8
        %s273 = scalar_lea.vmem %s1, %s272
        %s274 = sadd.s32 %s21, %s22
        %p275 = scmp.lt.s32.totalorder %s274, 0
        %s276 = scalar_select %p275, %s274, 0
        %s277 = smul.u32 2, %s276
        %s278 = sadd.s32 %s21, %s22
        %p279 = scmp.lt.s32.totalorder %s278, 0
        %s280 = scalar_select %p279, %s278, 0
        %s281 = smul.u32 2, %s280
        %p282 = scmp.lt.s32.totalorder %s281, 1
        %s283 = scalar_select %p282, %s281, 1
        %s284 = smul.addr %s283, 8
        %s285 = scalar_lea.vmem %s2, %s284
        %s286 = sadd.s32 %s21, %s22
        %p287 = scmp.lt.s32.totalorder %s286, 0
        %s288 = scalar_select %p287, %s286, 0
        %s289 = smul.u32 2, %s288
        %p290 = scmp.eq.s32.totalorder %s22, 0
        // Predicated region
        $region33: #{tpu_custom_call.1} parent=31 // pred_check
          %p291 = pneg %p290
        $region34: #{tpu_custom_call.1} parent=31 // pred_check_branch
          %293 = sbr.rel (%p291) target = $region36
        $region35: #{tpu_custom_call.1} parent=31 // pred_region
          %294 = vst [vmem:[%s253] sm:$0xff] 0.0
        $region36: #{tpu_custom_call.1} parent=31 // pred_fallthru
          _
        %v295 = vld [vmem:[%s261] sm:$0xff]
        %v296 = vld [vmem:[%s261 + $0x8] sm:$0xff]
        %v297 = vld [vmem:[%s273] sm:$0xff]
        %v298 = vld [vmem:[%s273 + $0x8] sm:$0xff]
        %v299 = vld [vmem:[%s285] sm:$0xff]
        %v300 = vld [vmem:[%s285 + $0x8] sm:$0xff]
        %s301 = sadd.s32 %s21, %s22
        %s302 = smul.u32 %s301, 16
        %v303 = vlaneseq
        %v304 = vshrl.u32 %v303, 7
        %v305 = vadd.s32 %v304, 8
        %v306 = vstv %s302
        %v307 = vadd.s32 %v306, %v304
        %v308 = vadd.s32 %v306, %v305
        %vm309 = vcmp.lt.s32.totalorder %v307, 16
        %vm310 = vcmp.lt.s32.totalorder %v308, 16
        %v311 = vlaneseq
        %v312 = vand.u32 %v311, 127
        %313 = vset.pattern.permute.xlu0 0
        %314 = vperm.xlu0 %313, %v297
        %v315 = vpop.permute.xlu0 %314
        %316 = vset.pattern.permute.xlu0 0
        %317 = vperm.xlu0 %316, %v298
        %v318 = vpop.permute.xlu0 %317
        %vm319 = vcmp.eq.s32.totalorder %v312, %v315
        %vm320 = vcmp.eq.s32.totalorder %v312, %v318
        %v321 = vsel %vm319, %v295, 0.0
        %v322 = vsel %vm320, %v296, 0.0
        %vm323 = vcmask 261120
        %v324 = vsel %vm323, %v321, 0.0
        %325 = vadd.xlane.f32.xlu0 %v324
        %v326 = vpop.xlane.xlu0 %325
        %v327 = vsel %vm323, %v322, 0.0
        %328 = vadd.xlane.f32.xlu0 %v327
        %v329 = vpop.xlane.xlu0 %328
        %v330 = vsel %vm323, %v295, 0.0
        %331 = vadd.xlane.f32.xlu0 %v330
        %v332 = vpop.xlane.xlu0 %331
        %v333 = vsel %vm323, %v296, 0.0
        %334 = vadd.xlane.f32.xlu0 %v333
        %v335 = vpop.xlane.xlu0 %334
        %v336 = vmul.f32 %v332, 0.0032258064
        %v337 = vmul.f32 %v335, 0.0032258064
        %v338 = vmul.f32 %v326, 0.8967742
        %v339 = vmul.f32 %v329, 0.8967742
        %v340 = vadd.f32 %v336, %v338
        %v341 = vadd.f32 %v337, %v339
        %v342 = vsub.f32 -0.6684817, %v340
        %v343 = vsub.f32 -0.6684817, %v341
        %v344 = vmul.f32 %v342, %v299
        %v345 = vmul.f32 %v343, %v300
        %v346 = vsel %vm309, %v344, 0.0
        %v347 = vsel %vm310, %v345, 0.0
        %v348 = vld [vmem:[%s253] sm:$0xff]
        %vm349 = vcmask 7168
        %v350 = vsel %vm349, %v346, 0.0
        %v351 = vsel %vm349, %v347, 0.0
        %v352 = vadd.f32 %v350, %v351
        %353 = vadd.xlane.f32.xlu0 %v352
        %v354 = vpop.xlane.xlu0 %353
        %v355 = vrot.slane %v354, 4
        %v356 = vadd.f32 %v354, %v355
        %v357 = vrot.slane %v356, 2
        %v358 = vadd.f32 %v356, %v357
        %v359 = vrot.slane %v358, 1
        %v360 = vadd.f32 %v358, %v359
        %s361 = vtos %v360
        %v362 = vstv %s361
        %v363 = vadd.f32 %v348, %v362
        %364 = vst [vmem:[%s253] sm:$0xff] %v363
        %s365 = sand.u32 %s133, 1
        %s366 = scalar_lea.sflag [#allocation3], %s365
        %s367 = sand.u32 %s133, 1
        %s368 = smul.addr %s367, 8
        %s369 = scalar_lea.vmem [#allocation2], %s368
        // Predicated region
        $region37: #{tpu_custom_call.1} parent=31 // pred_check
          %p370 = pneg %p143
        $region38: #{tpu_custom_call.1} parent=31 // pred_check_branch
          %372 = sbr.rel (%p370) target = $region40
        $region39: #{tpu_custom_call.1} parent=31 // pred_region
          %s374 = ssub.s32 128, 128
          %375 = vsyncadd %s366, %s374
          %s376 = smul.addr %s21, 128
          %s377 = scalar_lea.hbm %s3, %s376
          %s379 = sshll.u32 %s369, 4
          %s380 = int_to_ptr.vmem [resolvable:$true] %s379
          %382 = dma.vmem_to_hbm [thread:$0]  %s380, 128, %s377, %s366
        $region40: #{tpu_custom_call.1} parent=31 // pred_fallthru
          _
      $region32: #{tpu_custom_call.1} parent=5 // pred_fallthru
        _
      %p383 = scmp.le.s32.totalorder 2, %s12
      // Predicated region
      $region41: #{tpu_custom_call.1} parent=5 // pred_check
        %p384 = pneg %p383
      $region42: #{tpu_custom_call.1} parent=5 // pred_check_branch
        %386 = sbr.rel (%p384) target = $region44
      $region43: #{tpu_custom_call.1} parent=5 // pred_region
        %s387 = ssub.s32 %s12, 2
        // Predicated region
        $region45: #{tpu_custom_call.1} parent=43 // pred_check
          %p388 = pneg %p149
        $region46: #{tpu_custom_call.1} parent=43 // pred_check_branch
          %390 = sbr.rel (%p388) target = $region48
        $region47: #{tpu_custom_call.1} parent=43 // pred_region
          %s391 = sand.u32 %s134, 1
          %s392 = scalar_lea.sflag [#allocation3], %s391
          %s393 = sand.u32 %s134, 1
          %s394 = smul.addr %s393, 8
          %s395 = scalar_lea.vmem [#allocation2], %s394
          %396 = dma.done %s392, 128
        $region48: #{tpu_custom_call.1} parent=43 // pred_fallthru
          _
      $region44: #{tpu_custom_call.1} parent=5 // pred_fallthru
        _
    $region6: #{tpu_custom_call.1} parent=1 // loop_footer
      %s16 = sadd.s32 1, %s12
    $region7: #{tpu_custom_call.1} parent=1 // loop_footer_branch
      %11 = sbr.rel target = $region3
    $region8: #{tpu_custom_call.1} parent=1 // loop_exit
      _
    %397 = vsyncpa [#allocation3], 1
    %s398 = scalar_lea.sflag [#allocation3], 1
    %399 = vsyncpa %s398, 1

</llo_original>
